<compile_context>
chip_gen: v6e
topology: v6e:2x2x1
jax: 0.10.0
libtpu: 0.0.40
codegen_flags: <defaults>
</compile_context>

<pallas_src>
import functools

import jax
import jax.numpy as jnp
from jax import lax
from jax.experimental import pallas as pl
from jax.experimental.pallas import tpu as pltpu

_BIG = 1e30        # finite sentinel used to pre-fuse pair masks into distances
_THRESH = 1e-07


# ----------------------------------------------------------------------------
# Triplet ("relative") loss kernel
# ----------------------------------------------------------------------------
def _triplet_loss_kernel(d_pa_ref, d_an_ref, sum_ref, cnt_ref, *, pc, n_pchunks):
    """Grid step (i = anchor group of `ag` rows, j = negative lane chunk).

    d_pa_ref : (Bp, ag)  margin-folded, masked d_ap for the group's anchors;
               positives on sublanes, anchors on lanes (wrapper-transposed) so
               a per-anchor positive column is a cheap static lane slice.
    d_an_ref : (ag, tn)  masked d_an chunk; anchors on sublanes, negatives on
               lanes.
    sum_ref / cnt_ref : (pc, tn) f32 partial buckets, resident across j
               (output index map ignores j); reduced to scalars in plain JAX.
    """
    j = pl.program_id(1)

    @pl.when(j == 0)
    def _():
        sum_ref[...] = jnp.zeros_like(sum_ref)
        cnt_ref[...] = jnp.zeros_like(cnt_ref)

    ag, tn = d_an_ref.shape
    thresh = jnp.float32(_THRESH)
    unroll = min(8, n_pchunks)

    for k in range(ag):                 # static unroll over the group's anchors
        # Hoist the negative row (sublane broadcast) out of the positive loop.
        dan_b = jnp.broadcast_to(d_an_ref[k:k + 1, :], (pc, tn))      # (pc, tn)

        def body(p_idx, carry, _dan_b=dan_b, _k=k):
            s_acc, c_acc = carry
            start = pl.multiple_of(p_idx * pc, pc)
            dap_col = d_pa_ref[pl.ds(start, pc), _k:_k + 1]           # (pc, 1)
            # Margin is already folded into dap_col; masked-out pairs were
            # driven to -/+1e30 in the wrapper, so the relu and the >1e-7
            # count eliminate them with no extra mask math.
            raw = dap_col - _dan_b                                    # (pc, tn)
            s_acc = s_acc + jnp.maximum(raw, 0.0)
            c_acc = c_acc + (raw > thresh).astype(jnp.float32)
            return s_acc, c_acc

        init = (jnp.zeros((pc, tn), jnp.float32),
                jnp.zeros((pc, tn), jnp.float32))
        s_k, c_k = lax.fori_loop(0, n_pchunks, body, init, unroll=unroll)

        sum_ref[...] += s_k
        cnt_ref[...] += c_k


# ----------------------------------------------------------------------------
# Contrastive ("absolute") loss kernel
# ----------------------------------------------------------------------------
def _contrastive_loss_kernel(d_ap_ref, d_an_ref, pos_ref, neg_ref, cnt_ref, *,
                             margin, n_slabs, bw, n_cchunks):
    """One row block (rb, Bp) of the two pre-fused distance matrices.

    Per step we emit three (8, bw) vector buckets (sum d_ap^2, sum hinge^2,
    count hinge^2 > 1e-7) built from pure VPU adds (no cross-lane reduces, no
    SMEM scalar round trips); the scalar combine happens in plain JAX.
    """
    margin_f = jnp.float32(margin)
    thresh = jnp.float32(_THRESH)

    def slab(s_idx, carry):
        pos_acc, neg_acc, cnt_acc = carry
        r0 = pl.multiple_of(s_idx * 8, 8)
        for c in range(n_cchunks):                    # static column chunks
            dap = d_ap_ref[pl.ds(r0, 8), c * bw:(c + 1) * bw]         # (8, bw)
            dan = d_an_ref[pl.ds(r0, 8), c * bw:(c + 1) * bw]         # (8, bw)
            pos_acc = pos_acc + dap * dap             # masked-out -> 0
            ln = jnp.maximum(margin_f - dan, 0.0)     # masked-out -> relu(0)=0
            ln = ln * ln
            neg_acc = neg_acc + ln
            cnt_acc = cnt_acc + (ln > thresh).astype(jnp.float32)
        return pos_acc, neg_acc, cnt_acc

    zeros = jnp.zeros((8, bw), jnp.float32)
    pos, neg, cnt = lax.fori_loop(0, n_slabs, slab, (zeros, zeros, zeros),
                                  unroll=min(2, n_slabs))
    pos_ref[...] = pos
    neg_ref[...] = neg
    cnt_ref[...] = cnt


# ----------------------------------------------------------------------------
# Tiling helpers
# ----------------------------------------------------------------------------
def _pick_anchor_group(Bp, cap=32):
    """Anchors per grid block: multiple of 8 dividing Bp, capped for program
    size; keeps >=2 groups when possible so v7x can shard the parallel axis."""
    ag = 8
    target = min(cap, max(8, Bp // 2))
    while ag * 2 <= target and Bp % (ag * 2) == 0:
        ag *= 2
    return min(ag, Bp)


def _pick_lane_chunk(Bp, cap=512):
    """Negatives per lane chunk: whole row when it fits (n_j == 1), else the
    largest multiple-of-128 divisor of Bp up to `cap` (keeps the live vreg set
    of the unrolled inner loop well under the 64-vreg budget)."""
    if Bp <= cap or Bp % 128 != 0:
        return Bp
    tn = 128
    while tn * 2 <= cap and Bp % (tn * 2) == 0:
        tn *= 2
    return tn


def _pick_row_block(Bp, max_block_bytes=2 << 20):
    """Contrastive row block: multiple of 8 dividing Bp, ~2 MiB per block
    (double-buffered x2 inputs stays well under even v5e's 16 MiB scoped-VMEM
    default), keeping >=2 blocks when possible for the v7x 2-TC split."""
    rb = 8
    cap_elems = max_block_bytes // 4
    while (rb * 2 <= Bp and Bp % (rb * 2) == 0
           and (rb * 2) * Bp <= cap_elems and Bp // (rb * 2) >= 2):
        rb *= 2
    return rb


def _pad_to8(x, value):
    B = x.shape[0]
    Bp = ((B + 7) // 8) * 8
    if Bp == B:
        return x, Bp
    pad = Bp - B
    return jnp.pad(x, ((0, pad), (0, pad)), constant_values=value), Bp


# ----------------------------------------------------------------------------
# Wrappers
# ----------------------------------------------------------------------------
def triplet_loss_pallas(mask_ap, mask_an, distance_ap, distance_an, margin=1.0):
    f32 = jnp.float32

    # Fuse the pair masks AND the margin into the distances up front (O(B^2)
    # prep vs the O(B^3) kernel): masked positives -> -1e30, masked
    # negatives -> +1e30, valid positives carry +margin.
    d_ap_eff = jnp.where(mask_ap, distance_ap.astype(f32) + f32(margin),
                         f32(-_BIG))
    d_an_eff = jnp.where(mask_an, distance_an.astype(f32), f32(_BIG))

    # Ragged batch -> pad to a multiple of 8 with the same sentinels (padded
    # triplets contribute exactly 0 to both sum and count).
    d_ap_eff, Bp = _pad_to8(d_ap_eff, -_BIG)
    d_an_eff, _ = _pad_to8(d_an_eff, _BIG)

    ag = _pick_anchor_group(Bp)         # anchors per grid block
    tn = _pick_lane_chunk(Bp)           # negative-axis lane chunk per grid step
    pc = 8                              # positive-axis sublane chunk
    n_i, n_j, n_pchunks = Bp // ag, Bp // tn, Bp // pc

    # (n_i, Bp, ag): positives on sublanes, the group's anchors on lanes.
    d_pa = d_ap_eff.reshape(n_i, ag, Bp).transpose(0, 2, 1)

    kernel = functools.partial(_triplet_loss_kernel, pc=pc, n_pchunks=n_pchunks)
    out_sum, out_cnt = pl.pallas_call(
        kernel,
        out_shape=(jax.ShapeDtypeStruct((n_i, pc, tn), f32),
                   jax.ShapeDtypeStruct((n_i, pc, tn), f32)),
        grid_spec=pltpu.PrefetchScalarGridSpec(
            num_scalar_prefetch=0,
            grid=(n_i, n_j),
            in_specs=[
                pl.BlockSpec((None, Bp, ag), lambda i, j: (i, 0, 0)),
                pl.BlockSpec((ag, tn), lambda i, j: (i, j)),
            ],
            out_specs=[
                pl.BlockSpec((None, pc, tn), lambda i, j: (i, 0, 0)),
                pl.BlockSpec((None, pc, tn), lambda i, j: (i, 0, 0)),
            ],
        ),
        compiler_params=pltpu.CompilerParams(
            dimension_semantics=("parallel", "arbitrary")),
    )(d_pa, d_an_eff)

    # Final scalar reduction of the per-group partial buckets in plain JAX.
    # (f32 count, as in the reference; fine until counts approach 2^24.)
    return jnp.sum(out_sum) / (jnp.sum(out_cnt) + 1e-07)


def contrastive_loss_pallas(mask_ap, mask_an, distance_ap, distance_an,
                            margin=1.0):
    f32 = jnp.float32

    # Pre-fuse masks so the (HBM-bound) kernel streams only two f32 matrices:
    #   positives: masked-out -> 0       (contributes 0 to sum(d^2))
    #   negatives: masked-out -> margin  (relu(margin - margin) = 0 -> no term)
    d_ap_eff = jnp.where(mask_ap, distance_ap.astype(f32), f32(0.0))
    d_an_eff = jnp.where(mask_an, distance_an.astype(f32), f32(margin))

    d_ap_eff, Bp = _pad_to8(d_ap_eff, 0.0)
    d_an_eff, _ = _pad_to8(d_an_eff, float(margin))

    rb = _pick_row_block(Bp)            # rows per grid step
    bw = _pick_lane_chunk(Bp)           # bucket lane width / column chunk
    n_blocks = Bp // rb
    n_slabs = rb // 8
    n_cchunks = Bp // bw

    in_spec = pl.BlockSpec((rb, Bp), lambda i: (i, 0))
    out_spec = pl.BlockSpec((None, 8, bw), lambda i: (i, 0, 0))
    bucket = jax.ShapeDtypeStruct((n_blocks, 8, bw), f32)

    kernel = functools.partial(_contrastive_loss_kernel, margin=float(margin),
                               n_slabs=n_slabs, bw=bw, n_cchunks=n_cchunks)
    pos_b, neg_b, cnt_b = pl.pallas_call(
        kernel,
        out_shape=(bucket, bucket, bucket),
        grid_spec=pltpu.PrefetchScalarGridSpec(
            num_scalar_prefetch=0,
            grid=(n_blocks,),
            in_specs=[in_spec, in_spec],
            out_specs=[out_spec, out_spec, out_spec],
        ),
        compiler_params=pltpu.CompilerParams(
            dimension_semantics=("parallel",)),
    )(d_ap_eff, d_an_eff)

    # Scalar combine in plain JAX.  NB: matches the PyTorch reference, which
    # has no epsilon guard on either denominator.
    pos_cnt = jnp.sum(mask_ap).astype(f32)
    loss_pos = jnp.sum(pos_b) / pos_cnt
    loss_neg = jnp.sum(neg_b) / jnp.sum(cnt_b)
    return (jnp.sqrt(loss_pos) + jnp.sqrt(loss_neg)) * 0.5


class CRLossPallas:
    """JAX/Pallas port of CRLoss. No learnable parameters (loss module)."""

    def __init__(self, nclass, comparison='relative', p=None, k=None,
                 margin=1.0, device=None):
        self.p = p or 1.0 / nclass
        self.k = k
        self.nclass = nclass
        self.margin = margin
        self.device = device
        if comparison == 'relative':
            self.func = self._triplet_loss
        elif comparison == 'absolute':
            self.func = self._contrastive_loss
        elif comparison == 'distribution':
            self.func = self._distribution_loss
        else:
            self.func = self._triplet_loss

    # plain-JAX glue (indexing only, no hot-path compute)
    def _get_minor_samples(self, target, onehot=False):
        batch_size = target.shape[0]
        boundary = int(self.p * batch_size)
        cnt = jnp.bincount(target, length=self.nclass)
        mask_class = cnt < boundary
        mask_sparse = mask_class[target]
        if not onehot:
            return mask_sparse
        mask_onehot = jax.nn.one_hot(target, self.nclass, dtype=jnp.bool_)
        return mask_onehot & mask_sparse[:, None]

    def _triplet_loss(self, mask_ap, mask_an, distance_ap, distance_an):
        return triplet_loss_pallas(mask_ap, mask_an, distance_ap, distance_an,
                                   margin=self.margin)

    def _contrastive_loss(self, mask_ap, mask_an, distance_ap, distance_an):
        return contrastive_loss_pallas(mask_ap, mask_an, distance_ap,
                                       distance_an, margin=self.margin)

    _constrastive_loss = _contrastive_loss   # original (typo'd) PyTorch name

    def _distribution_loss(self, mask_ap, mask_an, distance_ap, distance_an):
        # TODO(synk): `_distribution_loss` is an empty `pass` stub in the
        # PyTorch module; nothing to lower.
        return None

    # TODO(synk): forward / _get_anchor_hard_sample_mask /
    # _get_anchor_sample_distance are abstract (NotImplementedError) in the
    # PyTorch module. Nothing to lower.


# ----------------------------------------------------------------------------
# Pure-JAX references (for correctness check)
# ----------------------------------------------------------------------------
def triplet_loss_ref(mask_ap, mask_an, d_ap, d_an, margin=1.0):
    t = d_ap[:, :, None] - d_an[:, None, :] + margin
    mask = (mask_ap[:, :, None] & mask_an[:, None, :]).astype(jnp.float32)
    t = jnp.maximum(mask * t, 0.0)
    num = (t > 1e-07).sum().astype(jnp.float32)
    return t.sum() / (num + 1e-07)


def contrastive_loss_ref(mask_ap, mask_an, d_ap, d_an, margin=1.0):
    lp = (mask_ap.astype(jnp.float32) * d_ap ** 2).sum() / mask_ap.sum()
    ln = jnp.maximum(margin - d_an, 0.0) ** 2
    ln = mask_an.astype(jnp.float32) * ln
    lneg = ln.sum() / (ln > 1e-07).sum()
    return (jnp.sqrt(lp) + jnp.sqrt(lneg)) / 2.0


# ----------------------------------------------------------------------------
if __name__ == "__main__":
    key = jax.random.PRNGKey(0)
    nclass = 4

    def make_inputs(k, B):
        k2, k3 = jax.random.split(k, 2)
        # deterministic labels guaranteeing both same- and different-class pairs
        labels = jnp.arange(B, dtype=jnp.int32) % nclass
        d_ap = jax.random.uniform(k2, (B, B), jnp.float32, 0.0, 2.0)
        d_an = jax.random.uniform(k3, (B, B), jnp.float32, 0.0, 2.0)
        same = labels[:, None] == labels[None, :]
        eye = jnp.eye(B, dtype=jnp.bool_)
        mask_ap = same & (~eye)      # anchor-positive pairs
        mask_an = ~same              # anchor-negative pairs
        return labels, mask_ap, mask_an, d_ap, d_an

    for margin in (1.0, 0.75):
        crloss = CRLossPallas(nclass=nclass, comparison='relative',
                              margin=margin)
        for B in (8, 20, 64):        # includes a ragged (non-multiple-of-8) B
            key, sub = jax.random.split(key)
            labels, mask_ap, mask_an, d_ap, d_an = make_inputs(sub, B)

            loss_tri = jax.block_until_ready(
                crloss.func(mask_ap, mask_an, d_ap, d_an))
            ref_tri = triplet_loss_ref(mask_ap, mask_an, d_ap, d_an,
                                       margin=margin)
            assert jnp.allclose(loss_tri, ref_tri, rtol=5e-4, atol=1e-5), \
                ("triplet", margin, B, loss_tri, ref_tri)

            loss_con = jax.block_until_ready(
                crloss._contrastive_loss(mask_ap, mask_an, d_ap, d_an))
            ref_con = contrastive_loss_ref(mask_ap, mask_an, d_ap, d_an,
                                           margin=margin)
            assert jnp.allclose(loss_con, ref_con, rtol=5e-4, atol=1e-5), \
                ("contrastive", margin, B, loss_con, ref_con)

            # exercise the minor-sample glue as well
            _ = jax.block_until_ready(
                crloss._get_minor_samples(labels, onehot=True))

    print("KERNEL_OK")
</pallas_src>

<mosaic_0001>
module attributes {stable_mosaic.version = 11 : i64} {
  func.func @_triplet_loss_kernel(%arg0: i32, %arg1: i32, %arg2: memref<1x8x8xf32, #tpu.memory_space<vmem>>, %arg3: memref<8x8xf32, #tpu.memory_space<vmem>>, %arg4: memref<1x8x8xf32, #tpu.memory_space<vmem>>, %arg5: memref<1x8x8xf32, #tpu.memory_space<vmem>>) attributes {dimension_semantics = [#tpu.dimension_semantics<parallel>, #tpu.dimension_semantics<arbitrary>], iteration_bounds = array<i64: 1, 1>, scalar_prefetch = 0 : i64, scratch_operands = 0 : i64, tpu.core_type = #tpu.core_type<tc>, window_params = [{transform_indices = @transform_0, window_bounds = array<i64: 1, 8, 8>}, {transform_indices = @transform_1, window_bounds = array<i64: 8, 8>}, {transform_indices = @transform_2, window_bounds = array<i64: 1, 8, 8>}, {transform_indices = @transform_3, window_bounds = array<i64: 1, 8, 8>}]} {
    %c0_i32 = arith.constant 0 : i32
    %0 = arith.cmpi eq, %arg1, %c0_i32 : i32
    %1 = arith.extui %0 : i1 to i32
    %c0_i32_0 = arith.constant 0 : i32
    %2 = arith.cmpi ne, %1, %c0_i32_0 : i32
    scf.if %2 {
      %cst_174 = arith.constant 0.000000e+00 : f32
      %259 = vector.broadcast %cst_174 : f32 to vector<8x8xf32>
      %c0_175 = arith.constant 0 : index
      %c0_176 = arith.constant 0 : index
      %c0_177 = arith.constant 0 : index
      %260 = vector.load %arg4[%c0_175, %c0_176, %c0_177] : memref<1x8x8xf32, #tpu.memory_space<vmem>>, vector<1x8x8xf32>
      %261 = vector.shape_cast %260 : vector<1x8x8xf32> to vector<8x8xf32>
      %262 = vector.shape_cast %259 : vector<8x8xf32> to vector<1x8x8xf32>
      tpu.vector_store %arg4[%c0_175, %c0_176, %c0_177], %262 {strides = array<i32>} : memref<1x8x8xf32, #tpu.memory_space<vmem>>, vector<1x8x8xf32>,
      %cst_178 = arith.constant 0.000000e+00 : f32
      %263 = vector.broadcast %cst_178 : f32 to vector<8x8xf32>
      %c0_179 = arith.constant 0 : index
      %c0_180 = arith.constant 0 : index
      %c0_181 = arith.constant 0 : index
      %264 = vector.load %arg5[%c0_179, %c0_180, %c0_181] : memref<1x8x8xf32, #tpu.memory_space<vmem>>, vector<1x8x8xf32>
      %265 = vector.shape_cast %264 : vector<1x8x8xf32> to vector<8x8xf32>
      %266 = vector.shape_cast %263 : vector<8x8xf32> to vector<1x8x8xf32>
      tpu.vector_store %arg5[%c0_179, %c0_180, %c0_181], %266 {strides = array<i32>} : memref<1x8x8xf32, #tpu.memory_space<vmem>>, vector<1x8x8xf32>,
    } else {
    }
    %c0 = arith.constant 0 : index
    %c0_1 = arith.constant 0 : index
    %3 = vector.load %arg3[%c0, %c0_1] : memref<8x8xf32, #tpu.memory_space<vmem>>, vector<1x8xf32>
    %4 = vector.shape_cast %3 : vector<1x8xf32> to vector<1x8xf32>
    %5 = vector.broadcast %4 : vector<1x8xf32> to vector<8x8xf32>
    %cst = arith.constant 0.000000e+00 : f32
    %6 = vector.broadcast %cst : f32 to vector<8x8xf32>
    %cst_2 = arith.constant 0.000000e+00 : f32
    %7 = vector.broadcast %cst_2 : f32 to vector<8x8xf32>
    %cst_3 = arith.constant 1.000000e-07 : f32
    %c0_i32_4 = arith.constant 0 : i32
    %c8_i32 = arith.constant 8 : i32
    %8 = arith.muli %c0_i32_4, %c8_i32 : i32
    %9 = tpu.assume_multiple %8, 8 : i32
    %c0_5 = arith.constant 0 : index
    %10 = arith.index_cast %9 : i32 to index
    %c0_6 = arith.constant 0 : index
    %11 = vector.load %arg2[%c0_5, %10, %c0_6] : memref<1x8x8xf32, #tpu.memory_space<vmem>>, vector<1x8x1xf32>
    %12 = vector.shape_cast %11 : vector<1x8x1xf32> to vector<8x1xf32>
    %13 = vector.broadcast %12 : vector<8x1xf32> to vector<8x8xf32>
    %14 = arith.subf %13, %5 : vector<8x8xf32>
    %cst_7 = arith.constant 0.000000e+00 : f32
    %15 = vector.broadcast %cst_7 : f32 to vector<8x8xf32>
    %16 = arith.maximumf %14, %15 : vector<8x8xf32>
    %17 = arith.addf %6, %16 : vector<8x8xf32>
    %18 = vector.broadcast %cst_3 : f32 to vector<8x8xf32>
    %19 = arith.cmpf ogt, %14, %18 : vector<8x8xf32>
    %20 = arith.extui %19 : vector<8x8xi1> to vector<8x8xi32>
    %21 = arith.sitofp %20 : vector<8x8xi32> to vector<8x8xf32>
    %22 = arith.addf %7, %21 : vector<8x8xf32>
    %c1_i32 = arith.constant 1 : i32
    %c0_8 = arith.constant 0 : index
    %c0_9 = arith.constant 0 : index
    %c0_10 = arith.constant 0 : index
    %23 = vector.load %arg4[%c0_8, %c0_9, %c0_10] : memref<1x8x8xf32, #tpu.memory_space<vmem>>, vector<1x8x8xf32>
    %24 = vector.shape_cast %23 : vector<1x8x8xf32> to vector<8x8xf32>
    %25 = arith.addf %24, %17 : vector<8x8xf32>
    %c0_11 = arith.constant 0 : index
    %c0_12 = arith.constant 0 : index
    %c0_13 = arith.constant 0 : index
    %26 = vector.load %arg4[%c0_11, %c0_12, %c0_13] : memref<1x8x8xf32, #tpu.memory_space<vmem>>, vector<1x8x8xf32>
    %27 = vector.shape_cast %26 : vector<1x8x8xf32> to vector<8x8xf32>
    %28 = vector.shape_cast %25 : vector<8x8xf32> to vector<1x8x8xf32>
    tpu.vector_store %arg4[%c0_11, %c0_12, %c0_13], %28 {strides = array<i32>} : memref<1x8x8xf32, #tpu.memory_space<vmem>>, vector<1x8x8xf32>,
    %c0_14 = arith.constant 0 : index
    %c0_15 = arith.constant 0 : index
    %c0_16 = arith.constant 0 : index
    %29 = vector.load %arg5[%c0_14, %c0_15, %c0_16] : memref<1x8x8xf32, #tpu.memory_space<vmem>>, vector<1x8x8xf32>
    %30 = vector.shape_cast %29 : vector<1x8x8xf32> to vector<8x8xf32>
    %31 = arith.addf %30, %22 : vector<8x8xf32>
    %c0_17 = arith.constant 0 : index
    %c0_18 = arith.constant 0 : index
    %c0_19 = arith.constant 0 : index
    %32 = vector.load %arg5[%c0_17, %c0_18, %c0_19] : memref<1x8x8xf32, #tpu.memory_space<vmem>>, vector<1x8x8xf32>
    %33 = vector.shape_cast %32 : vector<1x8x8xf32> to vector<8x8xf32>
    %34 = vector.shape_cast %31 : vector<8x8xf32> to vector<1x8x8xf32>
    tpu.vector_store %arg5[%c0_17, %c0_18, %c0_19], %34 {strides = array<i32>} : memref<1x8x8xf32, #tpu.memory_space<vmem>>, vector<1x8x8xf32>,
    %c1 = arith.constant 1 : index
    %c0_20 = arith.constant 0 : index
    %35 = vector.load %arg3[%c1, %c0_20] : memref<8x8xf32, #tpu.memory_space<vmem>>, vector<1x8xf32>
    %36 = vector.shape_cast %35 : vector<1x8xf32> to vector<1x8xf32>
    %37 = vector.broadcast %36 : vector<1x8xf32> to vector<8x8xf32>
    %cst_21 = arith.constant 0.000000e+00 : f32
    %38 = vector.broadcast %cst_21 : f32 to vector<8x8xf32>
    %cst_22 = arith.constant 0.000000e+00 : f32
    %39 = vector.broadcast %cst_22 : f32 to vector<8x8xf32>
    %cst_23 = arith.constant 1.000000e-07 : f32
    %c0_i32_24 = arith.constant 0 : i32
    %c8_i32_25 = arith.constant 8 : i32
    %40 = arith.muli %c0_i32_24, %c8_i32_25 : i32
    %41 = tpu.assume_multiple %40, 8 : i32
    %c0_26 = arith.constant 0 : index
    %42 = arith.index_cast %41 : i32 to index
    %c1_27 = arith.constant 1 : index
    %43 = vector.load %arg2[%c0_26, %42, %c1_27] : memref<1x8x8xf32, #tpu.memory_space<vmem>>, vector<1x8x1xf32>
    %44 = vector.shape_cast %43 : vector<1x8x1xf32> to vector<8x1xf32>
    %45 = vector.broadcast %44 : vector<8x1xf32> to vector<8x8xf32>
    %46 = arith.subf %45, %37 : vector<8x8xf32>
    %cst_28 = arith.constant 0.000000e+00 : f32
    %47 = vector.broadcast %cst_28 : f32 to vector<8x8xf32>
    %48 = arith.maximumf %46, %47 : vector<8x8xf32>
    %49 = arith.addf %38, %48 : vector<8x8xf32>
    %50 = vector.broadcast %cst_23 : f32 to vector<8x8xf32>
    %51 = arith.cmpf ogt, %46, %50 : vector<8x8xf32>
    %52 = arith.extui %51 : vector<8x8xi1> to vector<8x8xi32>
    %53 = arith.sitofp %52 : vector<8x8xi32> to vector<8x8xf32>
    %54 = arith.addf %39, %53 : vector<8x8xf32>
    %c1_i32_29 = arith.constant 1 : i32
    %c0_30 = arith.constant 0 : index
    %c0_31 = arith.constant 0 : index
    %c0_32 = arith.constant 0 : index
    %55 = vector.load %arg4[%c0_30, %c0_31, %c0_32] : memref<1x8x8xf32, #tpu.memory_space<vmem>>, vector<1x8x8xf32>
    %56 = vector.shape_cast %55 : vector<1x8x8xf32> to vector<8x8xf32>
    %57 = arith.addf %56, %49 : vector<8x8xf32>
    %c0_33 = arith.constant 0 : index
    %c0_34 = arith.constant 0 : index
    %c0_35 = arith.constant 0 : index
    %58 = vector.load %arg4[%c0_33, %c0_34, %c0_35] : memref<1x8x8xf32, #tpu.memory_space<vmem>>, vector<1x8x8xf32>
    %59 = vector.shape_cast %58 : vector<1x8x8xf32> to vector<8x8xf32>
    %60 = vector.shape_cast %57 : vector<8x8xf32> to vector<1x8x8xf32>
    tpu.vector_store %arg4[%c0_33, %c0_34, %c0_35], %60 {strides = array<i32>} : memref<1x8x8xf32, #tpu.memory_space<vmem>>, vector<1x8x8xf32>,
    %c0_36 = arith.constant 0 : index
    %c0_37 = arith.constant 0 : index
    %c0_38 = arith.constant 0 : index
    %61 = vector.load %arg5[%c0_36, %c0_37, %c0_38] : memref<1x8x8xf32, #tpu.memory_space<vmem>>, vector<1x8x8xf32>
    %62 = vector.shape_cast %61 : vector<1x8x8xf32> to vector<8x8xf32>
    %63 = arith.addf %62, %54 : vector<8x8xf32>
    %c0_39 = arith.constant 0 : index
    %c0_40 = arith.constant 0 : index
    %c0_41 = arith.constant 0 : index
    %64 = vector.load %arg5[%c0_39, %c0_40, %c0_41] : memref<1x8x8xf32, #tpu.memory_space<vmem>>, vector<1x8x8xf32>
    %65 = vector.shape_cast %64 : vector<1x8x8xf32> to vector<8x8xf32>
    %66 = vector.shape_cast %63 : vector<8x8xf32> to vector<1x8x8xf32>
    tpu.vector_store %arg5[%c0_39, %c0_40, %c0_41], %66 {strides = array<i32>} : memref<1x8x8xf32, #tpu.memory_space<vmem>>, vector<1x8x8xf32>,
    %c2 = arith.constant 2 : index
    %c0_42 = arith.constant 0 : index
    %67 = vector.load %arg3[%c2, %c0_42] : memref<8x8xf32, #tpu.memory_space<vmem>>, vector<1x8xf32>
    %68 = vector.shape_cast %67 : vector<1x8xf32> to vector<1x8xf32>
    %69 = vector.broadcast %68 : vector<1x8xf32> to vector<8x8xf32>
    %cst_43 = arith.constant 0.000000e+00 : f32
    %70 = vector.broadcast %cst_43 : f32 to vector<8x8xf32>
    %cst_44 = arith.constant 0.000000e+00 : f32
    %71 = vector.broadcast %cst_44 : f32 to vector<8x8xf32>
    %cst_45 = arith.constant 1.000000e-07 : f32
    %c0_i32_46 = arith.constant 0 : i32
    %c8_i32_47 = arith.constant 8 : i32
    %72 = arith.muli %c0_i32_46, %c8_i32_47 : i32
    %73 = tpu.assume_multiple %72, 8 : i32
    %c0_48 = arith.constant 0 : index
    %74 = arith.index_cast %73 : i32 to index
    %c2_49 = arith.constant 2 : index
    %75 = vector.load %arg2[%c0_48, %74, %c2_49] : memref<1x8x8xf32, #tpu.memory_space<vmem>>, vector<1x8x1xf32>
    %76 = vector.shape_cast %75 : vector<1x8x1xf32> to vector<8x1xf32>
    %77 = vector.broadcast %76 : vector<8x1xf32> to vector<8x8xf32>
    %78 = arith.subf %77, %69 : vector<8x8xf32>
    %cst_50 = arith.constant 0.000000e+00 : f32
    %79 = vector.broadcast %cst_50 : f32 to vector<8x8xf32>
    %80 = arith.maximumf %78, %79 : vector<8x8xf32>
    %81 = arith.addf %70, %80 : vector<8x8xf32>
    %82 = vector.broadcast %cst_45 : f32 to vector<8x8xf32>
    %83 = arith.cmpf ogt, %78, %82 : vector<8x8xf32>
    %84 = arith.extui %83 : vector<8x8xi1> to vector<8x8xi32>
    %85 = arith.sitofp %84 : vector<8x8xi32> to vector<8x8xf32>
    %86 = arith.addf %71, %85 : vector<8x8xf32>
    %c1_i32_51 = arith.constant 1 : i32
    %c0_52 = arith.constant 0 : index
    %c0_53 = arith.constant 0 : index
    %c0_54 = arith.constant 0 : index
    %87 = vector.load %arg4[%c0_52, %c0_53, %c0_54] : memref<1x8x8xf32, #tpu.memory_space<vmem>>, vector<1x8x8xf32>
    %88 = vector.shape_cast %87 : vector<1x8x8xf32> to vector<8x8xf32>
    %89 = arith.addf %88, %81 : vector<8x8xf32>
    %c0_55 = arith.constant 0 : index
    %c0_56 = arith.constant 0 : index
    %c0_57 = arith.constant 0 : index
    %90 = vector.load %arg4[%c0_55, %c0_56, %c0_57] : memref<1x8x8xf32, #tpu.memory_space<vmem>>, vector<1x8x8xf32>
    %91 = vector.shape_cast %90 : vector<1x8x8xf32> to vector<8x8xf32>
    %92 = vector.shape_cast %89 : vector<8x8xf32> to vector<1x8x8xf32>
    tpu.vector_store %arg4[%c0_55, %c0_56, %c0_57], %92 {strides = array<i32>} : memref<1x8x8xf32, #tpu.memory_space<vmem>>, vector<1x8x8xf32>,
    %c0_58 = arith.constant 0 : index
    %c0_59 = arith.constant 0 : index
    %c0_60 = arith.constant 0 : index
    %93 = vector.load %arg5[%c0_58, %c0_59, %c0_60] : memref<1x8x8xf32, #tpu.memory_space<vmem>>, vector<1x8x8xf32>
    %94 = vector.shape_cast %93 : vector<1x8x8xf32> to vector<8x8xf32>
    %95 = arith.addf %94, %86 : vector<8x8xf32>
    %c0_61 = arith.constant 0 : index
    %c0_62 = arith.constant 0 : index
    %c0_63 = arith.constant 0 : index
    %96 = vector.load %arg5[%c0_61, %c0_62, %c0_63] : memref<1x8x8xf32, #tpu.memory_space<vmem>>, vector<1x8x8xf32>
    %97 = vector.shape_cast %96 : vector<1x8x8xf32> to vector<8x8xf32>
    %98 = vector.shape_cast %95 : vector<8x8xf32> to vector<1x8x8xf32>
    tpu.vector_store %arg5[%c0_61, %c0_62, %c0_63], %98 {strides = array<i32>} : memref<1x8x8xf32, #tpu.memory_space<vmem>>, vector<1x8x8xf32>,
    %c3 = arith.constant 3 : index
    %c0_64 = arith.constant 0 : index
    %99 = vector.load %arg3[%c3, %c0_64] : memref<8x8xf32, #tpu.memory_space<vmem>>, vector<1x8xf32>
    %100 = vector.shape_cast %99 : vector<1x8xf32> to vector<1x8xf32>
    %101 = vector.broadcast %100 : vector<1x8xf32> to vector<8x8xf32>
    %cst_65 = arith.constant 0.000000e+00 : f32
    %102 = vector.broadcast %cst_65 : f32 to vector<8x8xf32>
    %cst_66 = arith.constant 0.000000e+00 : f32
    %103 = vector.broadcast %cst_66 : f32 to vector<8x8xf32>
    %cst_67 = arith.constant 1.000000e-07 : f32
    %c0_i32_68 = arith.constant 0 : i32
    %c8_i32_69 = arith.constant 8 : i32
    %104 = arith.muli %c0_i32_68, %c8_i32_69 : i32
    %105 = tpu.assume_multiple %104, 8 : i32
    %c0_70 = arith.constant 0 : index
    %106 = arith.index_cast %105 : i32 to index
    %c3_71 = arith.constant 3 : index
    %107 = vector.load %arg2[%c0_70, %106, %c3_71] : memref<1x8x8xf32, #tpu.memory_space<vmem>>, vector<1x8x1xf32>
    %108 = vector.shape_cast %107 : vector<1x8x1xf32> to vector<8x1xf32>
    %109 = vector.broadcast %108 : vector<8x1xf32> to vector<8x8xf32>
    %110 = arith.subf %109, %101 : vector<8x8xf32>
    %cst_72 = arith.constant 0.000000e+00 : f32
    %111 = vector.broadcast %cst_72 : f32 to vector<8x8xf32>
    %112 = arith.maximumf %110, %111 : vector<8x8xf32>
    %113 = arith.addf %102, %112 : vector<8x8xf32>
    %114 = vector.broadcast %cst_67 : f32 to vector<8x8xf32>
    %115 = arith.cmpf ogt, %110, %114 : vector<8x8xf32>
    %116 = arith.extui %115 : vector<8x8xi1> to vector<8x8xi32>
    %117 = arith.sitofp %116 : vector<8x8xi32> to vector<8x8xf32>
    %118 = arith.addf %103, %117 : vector<8x8xf32>
    %c1_i32_73 = arith.constant 1 : i32
    %c0_74 = arith.constant 0 : index
    %c0_75 = arith.constant 0 : index
    %c0_76 = arith.constant 0 : index
    %119 = vector.load %arg4[%c0_74, %c0_75, %c0_76] : memref<1x8x8xf32, #tpu.memory_space<vmem>>, vector<1x8x8xf32>
    %120 = vector.shape_cast %119 : vector<1x8x8xf32> to vector<8x8xf32>
    %121 = arith.addf %120, %113 : vector<8x8xf32>
    %c0_77 = arith.constant 0 : index
    %c0_78 = arith.constant 0 : index
    %c0_79 = arith.constant 0 : index
    %122 = vector.load %arg4[%c0_77, %c0_78, %c0_79] : memref<1x8x8xf32, #tpu.memory_space<vmem>>, vector<1x8x8xf32>
    %123 = vector.shape_cast %122 : vector<1x8x8xf32> to vector<8x8xf32>
    %124 = vector.shape_cast %121 : vector<8x8xf32> to vector<1x8x8xf32>
    tpu.vector_store %arg4[%c0_77, %c0_78, %c0_79], %124 {strides = array<i32>} : memref<1x8x8xf32, #tpu.memory_space<vmem>>, vector<1x8x8xf32>,
    %c0_80 = arith.constant 0 : index
    %c0_81 = arith.constant 0 : index
    %c0_82 = arith.constant 0 : index
    %125 = vector.load %arg5[%c0_80, %c0_81, %c0_82] : memref<1x8x8xf32, #tpu.memory_space<vmem>>, vector<1x8x8xf32>
    %126 = vector.shape_cast %125 : vector<1x8x8xf32> to vector<8x8xf32>
    %127 = arith.addf %126, %118 : vector<8x8xf32>
    %c0_83 = arith.constant 0 : index
    %c0_84 = arith.constant 0 : index
    %c0_85 = arith.constant 0 : index
    %128 = vector.load %arg5[%c0_83, %c0_84, %c0_85] : memref<1x8x8xf32, #tpu.memory_space<vmem>>, vector<1x8x8xf32>
    %129 = vector.shape_cast %128 : vector<1x8x8xf32> to vector<8x8xf32>
    %130 = vector.shape_cast %127 : vector<8x8xf32> to vector<1x8x8xf32>
    tpu.vector_store %arg5[%c0_83, %c0_84, %c0_85], %130 {strides = array<i32>} : memref<1x8x8xf32, #tpu.memory_space<vmem>>, vector<1x8x8xf32>,
    %c4 = arith.constant 4 : index
    %c0_86 = arith.constant 0 : index
    %131 = vector.load %arg3[%c4, %c0_86] : memref<8x8xf32, #tpu.memory_space<vmem>>, vector<1x8xf32>
    %132 = vector.shape_cast %131 : vector<1x8xf32> to vector<1x8xf32>
    %133 = vector.broadcast %132 : vector<1x8xf32> to vector<8x8xf32>
    %cst_87 = arith.constant 0.000000e+00 : f32
    %134 = vector.broadcast %cst_87 : f32 to vector<8x8xf32>
    %cst_88 = arith.constant 0.000000e+00 : f32
    %135 = vector.broadcast %cst_88 : f32 to vector<8x8xf32>
    %cst_89 = arith.constant 1.000000e-07 : f32
    %c0_i32_90 = arith.constant 0 : i32
    %c8_i32_91 = arith.constant 8 : i32
    %136 = arith.muli %c0_i32_90, %c8_i32_91 : i32
    %137 = tpu.assume_multiple %136, 8 : i32
    %c0_92 = arith.constant 0 : index
    %138 = arith.index_cast %137 : i32 to index
    %c4_93 = arith.constant 4 : index
    %139 = vector.load %arg2[%c0_92, %138, %c4_93] : memref<1x8x8xf32, #tpu.memory_space<vmem>>, vector<1x8x1xf32>
    %140 = vector.shape_cast %139 : vector<1x8x1xf32> to vector<8x1xf32>
    %141 = vector.broadcast %140 : vector<8x1xf32> to vector<8x8xf32>
    %142 = arith.subf %141, %133 : vector<8x8xf32>
    %cst_94 = arith.constant 0.000000e+00 : f32
    %143 = vector.broadcast %cst_94 : f32 to vector<8x8xf32>
    %144 = arith.maximumf %142, %143 : vector<8x8xf32>
    %145 = arith.addf %134, %144 : vector<8x8xf32>
    %146 = vector.broadcast %cst_89 : f32 to vector<8x8xf32>
    %147 = arith.cmpf ogt, %142, %146 : vector<8x8xf32>
    %148 = arith.extui %147 : vector<8x8xi1> to vector<8x8xi32>
    %149 = arith.sitofp %148 : vector<8x8xi32> to vector<8x8xf32>
    %150 = arith.addf %135, %149 : vector<8x8xf32>
    %c1_i32_95 = arith.constant 1 : i32
    %c0_96 = arith.constant 0 : index
    %c0_97 = arith.constant 0 : index
    %c0_98 = arith.constant 0 : index
    %151 = vector.load %arg4[%c0_96, %c0_97, %c0_98] : memref<1x8x8xf32, #tpu.memory_space<vmem>>, vector<1x8x8xf32>
    %152 = vector.shape_cast %151 : vector<1x8x8xf32> to vector<8x8xf32>
    %153 = arith.addf %152, %145 : vector<8x8xf32>
    %c0_99 = arith.constant 0 : index
    %c0_100 = arith.constant 0 : index
    %c0_101 = arith.constant 0 : index
    %154 = vector.load %arg4[%c0_99, %c0_100, %c0_101] : memref<1x8x8xf32, #tpu.memory_space<vmem>>, vector<1x8x8xf32>
    %155 = vector.shape_cast %154 : vector<1x8x8xf32> to vector<8x8xf32>
    %156 = vector.shape_cast %153 : vector<8x8xf32> to vector<1x8x8xf32>
    tpu.vector_store %arg4[%c0_99, %c0_100, %c0_101], %156 {strides = array<i32>} : memref<1x8x8xf32, #tpu.memory_space<vmem>>, vector<1x8x8xf32>,
    %c0_102 = arith.constant 0 : index
    %c0_103 = arith.constant 0 : index
    %c0_104 = arith.constant 0 : index
    %157 = vector.load %arg5[%c0_102, %c0_103, %c0_104] : memref<1x8x8xf32, #tpu.memory_space<vmem>>, vector<1x8x8xf32>
    %158 = vector.shape_cast %157 : vector<1x8x8xf32> to vector<8x8xf32>
    %159 = arith.addf %158, %150 : vector<8x8xf32>
    %c0_105 = arith.constant 0 : index
    %c0_106 = arith.constant 0 : index
    %c0_107 = arith.constant 0 : index
    %160 = vector.load %arg5[%c0_105, %c0_106, %c0_107] : memref<1x8x8xf32, #tpu.memory_space<vmem>>, vector<1x8x8xf32>
    %161 = vector.shape_cast %160 : vector<1x8x8xf32> to vector<8x8xf32>
    %162 = vector.shape_cast %159 : vector<8x8xf32> to vector<1x8x8xf32>
    tpu.vector_store %arg5[%c0_105, %c0_106, %c0_107], %162 {strides = array<i32>} : memref<1x8x8xf32, #tpu.memory_space<vmem>>, vector<1x8x8xf32>,
    %c5 = arith.constant 5 : index
    %c0_108 = arith.constant 0 : index
    %163 = vector.load %arg3[%c5, %c0_108] : memref<8x8xf32, #tpu.memory_space<vmem>>, vector<1x8xf32>
    %164 = vector.shape_cast %163 : vector<1x8xf32> to vector<1x8xf32>
    %165 = vector.broadcast %164 : vector<1x8xf32> to vector<8x8xf32>
    %cst_109 = arith.constant 0.000000e+00 : f32
    %166 = vector.broadcast %cst_109 : f32 to vector<8x8xf32>
    %cst_110 = arith.constant 0.000000e+00 : f32
    %167 = vector.broadcast %cst_110 : f32 to vector<8x8xf32>
    %cst_111 = arith.constant 1.000000e-07 : f32
    %c0_i32_112 = arith.constant 0 : i32
    %c8_i32_113 = arith.constant 8 : i32
    %168 = arith.muli %c0_i32_112, %c8_i32_113 : i32
    %169 = tpu.assume_multiple %168, 8 : i32
    %c0_114 = arith.constant 0 : index
    %170 = arith.index_cast %169 : i32 to index
    %c5_115 = arith.constant 5 : index
    %171 = vector.load %arg2[%c0_114, %170, %c5_115] : memref<1x8x8xf32, #tpu.memory_space<vmem>>, vector<1x8x1xf32>
    %172 = vector.shape_cast %171 : vector<1x8x1xf32> to vector<8x1xf32>
    %173 = vector.broadcast %172 : vector<8x1xf32> to vector<8x8xf32>
    %174 = arith.subf %173, %165 : vector<8x8xf32>
    %cst_116 = arith.constant 0.000000e+00 : f32
    %175 = vector.broadcast %cst_116 : f32 to vector<8x8xf32>
    %176 = arith.maximumf %174, %175 : vector<8x8xf32>
    %177 = arith.addf %166, %176 : vector<8x8xf32>
    %178 = vector.broadcast %cst_111 : f32 to vector<8x8xf32>
    %179 = arith.cmpf ogt, %174, %178 : vector<8x8xf32>
    %180 = arith.extui %179 : vector<8x8xi1> to vector<8x8xi32>
    %181 = arith.sitofp %180 : vector<8x8xi32> to vector<8x8xf32>
    %182 = arith.addf %167, %181 : vector<8x8xf32>
    %c1_i32_117 = arith.constant 1 : i32
    %c0_118 = arith.constant 0 : index
    %c0_119 = arith.constant 0 : index
    %c0_120 = arith.constant 0 : index
    %183 = vector.load %arg4[%c0_118, %c0_119, %c0_120] : memref<1x8x8xf32, #tpu.memory_space<vmem>>, vector<1x8x8xf32>
    %184 = vector.shape_cast %183 : vector<1x8x8xf32> to vector<8x8xf32>
    %185 = arith.addf %184, %177 : vector<8x8xf32>
    %c0_121 = arith.constant 0 : index
    %c0_122 = arith.constant 0 : index
    %c0_123 = arith.constant 0 : index
    %186 = vector.load %arg4[%c0_121, %c0_122, %c0_123] : memref<1x8x8xf32, #tpu.memory_space<vmem>>, vector<1x8x8xf32>
    %187 = vector.shape_cast %186 : vector<1x8x8xf32> to vector<8x8xf32>
    %188 = vector.shape_cast %185 : vector<8x8xf32> to vector<1x8x8xf32>
    tpu.vector_store %arg4[%c0_121, %c0_122, %c0_123], %188 {strides = array<i32>} : memref<1x8x8xf32, #tpu.memory_space<vmem>>, vector<1x8x8xf32>,
    %c0_124 = arith.constant 0 : index
    %c0_125 = arith.constant 0 : index
    %c0_126 = arith.constant 0 : index
    %189 = vector.load %arg5[%c0_124, %c0_125, %c0_126] : memref<1x8x8xf32, #tpu.memory_space<vmem>>, vector<1x8x8xf32>
    %190 = vector.shape_cast %189 : vector<1x8x8xf32> to vector<8x8xf32>
    %191 = arith.addf %190, %182 : vector<8x8xf32>
    %c0_127 = arith.constant 0 : index
    %c0_128 = arith.constant 0 : index
    %c0_129 = arith.constant 0 : index
    %192 = vector.load %arg5[%c0_127, %c0_128, %c0_129] : memref<1x8x8xf32, #tpu.memory_space<vmem>>, vector<1x8x8xf32>
    %193 = vector.shape_cast %192 : vector<1x8x8xf32> to vector<8x8xf32>
    %194 = vector.shape_cast %191 : vector<8x8xf32> to vector<1x8x8xf32>
    tpu.vector_store %arg5[%c0_127, %c0_128, %c0_129], %194 {strides = array<i32>} : memref<1x8x8xf32, #tpu.memory_space<vmem>>, vector<1x8x8xf32>,
    %c6 = arith.constant 6 : index
    %c0_130 = arith.constant 0 : index
    %195 = vector.load %arg3[%c6, %c0_130] : memref<8x8xf32, #tpu.memory_space<vmem>>, vector<1x8xf32>
    %196 = vector.shape_cast %195 : vector<1x8xf32> to vector<1x8xf32>
    %197 = vector.broadcast %196 : vector<1x8xf32> to vector<8x8xf32>
    %cst_131 = arith.constant 0.000000e+00 : f32
    %198 = vector.broadcast %cst_131 : f32 to vector<8x8xf32>
    %cst_132 = arith.constant 0.000000e+00 : f32
    %199 = vector.broadcast %cst_132 : f32 to vector<8x8xf32>
    %cst_133 = arith.constant 1.000000e-07 : f32
    %c0_i32_134 = arith.constant 0 : i32
    %c8_i32_135 = arith.constant 8 : i32
    %200 = arith.muli %c0_i32_134, %c8_i32_135 : i32
    %201 = tpu.assume_multiple %200, 8 : i32
    %c0_136 = arith.constant 0 : index
    %202 = arith.index_cast %201 : i32 to index
    %c6_137 = arith.constant 6 : index
    %203 = vector.load %arg2[%c0_136, %202, %c6_137] : memref<1x8x8xf32, #tpu.memory_space<vmem>>, vector<1x8x1xf32>
    %204 = vector.shape_cast %203 : vector<1x8x1xf32> to vector<8x1xf32>
    %205 = vector.broadcast %204 : vector<8x1xf32> to vector<8x8xf32>
    %206 = arith.subf %205, %197 : vector<8x8xf32>
    %cst_138 = arith.constant 0.000000e+00 : f32
    %207 = vector.broadcast %cst_138 : f32 to vector<8x8xf32>
    %208 = arith.maximumf %206, %207 : vector<8x8xf32>
    %209 = arith.addf %198, %208 : vector<8x8xf32>
    %210 = vector.broadcast %cst_133 : f32 to vector<8x8xf32>
    %211 = arith.cmpf ogt, %206, %210 : vector<8x8xf32>
    %212 = arith.extui %211 : vector<8x8xi1> to vector<8x8xi32>
    %213 = arith.sitofp %212 : vector<8x8xi32> to vector<8x8xf32>
    %214 = arith.addf %199, %213 : vector<8x8xf32>
    %c1_i32_139 = arith.constant 1 : i32
    %c0_140 = arith.constant 0 : index
    %c0_141 = arith.constant 0 : index
    %c0_142 = arith.constant 0 : index
    %215 = vector.load %arg4[%c0_140, %c0_141, %c0_142] : memref<1x8x8xf32, #tpu.memory_space<vmem>>, vector<1x8x8xf32>
    %216 = vector.shape_cast %215 : vector<1x8x8xf32> to vector<8x8xf32>
    %217 = arith.addf %216, %209 : vector<8x8xf32>
    %c0_143 = arith.constant 0 : index
    %c0_144 = arith.constant 0 : index
    %c0_145 = arith.constant 0 : index
    %218 = vector.load %arg4[%c0_143, %c0_144, %c0_145] : memref<1x8x8xf32, #tpu.memory_space<vmem>>, vector<1x8x8xf32>
    %219 = vector.shape_cast %218 : vector<1x8x8xf32> to vector<8x8xf32>
    %220 = vector.shape_cast %217 : vector<8x8xf32> to vector<1x8x8xf32>
    tpu.vector_store %arg4[%c0_143, %c0_144, %c0_145], %220 {strides = array<i32>} : memref<1x8x8xf32, #tpu.memory_space<vmem>>, vector<1x8x8xf32>,
    %c0_146 = arith.constant 0 : index
    %c0_147 = arith.constant 0 : index
    %c0_148 = arith.constant 0 : index
    %221 = vector.load %arg5[%c0_146, %c0_147, %c0_148] : memref<1x8x8xf32, #tpu.memory_space<vmem>>, vector<1x8x8xf32>
    %222 = vector.shape_cast %221 : vector<1x8x8xf32> to vector<8x8xf32>
    %223 = arith.addf %222, %214 : vector<8x8xf32>
    %c0_149 = arith.constant 0 : index
    %c0_150 = arith.constant 0 : index
    %c0_151 = arith.constant 0 : index
    %224 = vector.load %arg5[%c0_149, %c0_150, %c0_151] : memref<1x8x8xf32, #tpu.memory_space<vmem>>, vector<1x8x8xf32>
    %225 = vector.shape_cast %224 : vector<1x8x8xf32> to vector<8x8xf32>
    %226 = vector.shape_cast %223 : vector<8x8xf32> to vector<1x8x8xf32>
    tpu.vector_store %arg5[%c0_149, %c0_150, %c0_151], %226 {strides = array<i32>} : memref<1x8x8xf32, #tpu.memory_space<vmem>>, vector<1x8x8xf32>,
    %c7 = arith.constant 7 : index
    %c0_152 = arith.constant 0 : index
    %227 = vector.load %arg3[%c7, %c0_152] : memref<8x8xf32, #tpu.memory_space<vmem>>, vector<1x8xf32>
    %228 = vector.shape_cast %227 : vector<1x8xf32> to vector<1x8xf32>
    %229 = vector.broadcast %228 : vector<1x8xf32> to vector<8x8xf32>
    %cst_153 = arith.constant 0.000000e+00 : f32
    %230 = vector.broadcast %cst_153 : f32 to vector<8x8xf32>
    %cst_154 = arith.constant 0.000000e+00 : f32
    %231 = vector.broadcast %cst_154 : f32 to vector<8x8xf32>
    %cst_155 = arith.constant 1.000000e-07 : f32
    %c0_i32_156 = arith.constant 0 : i32
    %c8_i32_157 = arith.constant 8 : i32
    %232 = arith.muli %c0_i32_156, %c8_i32_157 : i32
    %233 = tpu.assume_multiple %232, 8 : i32
    %c0_158 = arith.constant 0 : index
    %234 = arith.index_cast %233 : i32 to index
    %c7_159 = arith.constant 7 : index
    %235 = vector.load %arg2[%c0_158, %234, %c7_159] : memref<1x8x8xf32, #tpu.memory_space<vmem>>, vector<1x8x1xf32>
    %236 = vector.shape_cast %235 : vector<1x8x1xf32> to vector<8x1xf32>
    %237 = vector.broadcast %236 : vector<8x1xf32> to vector<8x8xf32>
    %238 = arith.subf %237, %229 : vector<8x8xf32>
    %cst_160 = arith.constant 0.000000e+00 : f32
    %239 = vector.broadcast %cst_160 : f32 to vector<8x8xf32>
    %240 = arith.maximumf %238, %239 : vector<8x8xf32>
    %241 = arith.addf %230, %240 : vector<8x8xf32>
    %242 = vector.broadcast %cst_155 : f32 to vector<8x8xf32>
    %243 = arith.cmpf ogt, %238, %242 : vector<8x8xf32>
    %244 = arith.extui %243 : vector<8x8xi1> to vector<8x8xi32>
    %245 = arith.sitofp %244 : vector<8x8xi32> to vector<8x8xf32>
    %246 = arith.addf %231, %245 : vector<8x8xf32>
    %c1_i32_161 = arith.constant 1 : i32
    %c0_162 = arith.constant 0 : index
    %c0_163 = arith.constant 0 : index
    %c0_164 = arith.constant 0 : index
    %247 = vector.load %arg4[%c0_162, %c0_163, %c0_164] : memref<1x8x8xf32, #tpu.memory_space<vmem>>, vector<1x8x8xf32>
    %248 = vector.shape_cast %247 : vector<1x8x8xf32> to vector<8x8xf32>
    %249 = arith.addf %248, %241 : vector<8x8xf32>
    %c0_165 = arith.constant 0 : index
    %c0_166 = arith.constant 0 : index
    %c0_167 = arith.constant 0 : index
    %250 = vector.load %arg4[%c0_165, %c0_166, %c0_167] : memref<1x8x8xf32, #tpu.memory_space<vmem>>, vector<1x8x8xf32>
    %251 = vector.shape_cast %250 : vector<1x8x8xf32> to vector<8x8xf32>
    %252 = vector.shape_cast %249 : vector<8x8xf32> to vector<1x8x8xf32>
    tpu.vector_store %arg4[%c0_165, %c0_166, %c0_167], %252 {strides = array<i32>} : memref<1x8x8xf32, #tpu.memory_space<vmem>>, vector<1x8x8xf32>,
    %c0_168 = arith.constant 0 : index
    %c0_169 = arith.constant 0 : index
    %c0_170 = arith.constant 0 : index
    %253 = vector.load %arg5[%c0_168, %c0_169, %c0_170] : memref<1x8x8xf32, #tpu.memory_space<vmem>>, vector<1x8x8xf32>
    %254 = vector.shape_cast %253 : vector<1x8x8xf32> to vector<8x8xf32>
    %255 = arith.addf %254, %246 : vector<8x8xf32>
    %c0_171 = arith.constant 0 : index
    %c0_172 = arith.constant 0 : index
    %c0_173 = arith.constant 0 : index
    %256 = vector.load %arg5[%c0_171, %c0_172, %c0_173] : memref<1x8x8xf32, #tpu.memory_space<vmem>>, vector<1x8x8xf32>
    %257 = vector.shape_cast %256 : vector<1x8x8xf32> to vector<8x8xf32>
    %258 = vector.shape_cast %255 : vector<8x8xf32> to vector<1x8x8xf32>
    tpu.vector_store %arg5[%c0_171, %c0_172, %c0_173], %258 {strides = array<i32>} : memref<1x8x8xf32, #tpu.memory_space<vmem>>, vector<1x8x8xf32>,
    return
  }
  func.func @transform_0(%arg0: i32, %arg1: i32) -> (i32, i32, i32) {
    %c0_i32 = arith.constant 0 : i32
    %c0_i32_0 = arith.constant 0 : i32
    %c0_i32_1 = arith.constant 0 : i32
    return %arg0, %c0_i32, %c0_i32_0 : i32, i32, i32
  }
  func.func @transform_1(%arg0: i32, %arg1: i32) -> (i32, i32) {
    %c0_i32 = arith.constant 0 : i32
    return %arg0, %arg1 : i32, i32
  }
  func.func @transform_2(%arg0: i32, %arg1: i32) -> (i32, i32, i32) {
    %c0_i32 = arith.constant 0 : i32
    %c0_i32_0 = arith.constant 0 : i32
    %c0_i32_1 = arith.constant 0 : i32
    return %arg0, %c0_i32, %c0_i32_0 : i32, i32, i32
  }
  func.func @transform_3(%arg0: i32, %arg1: i32) -> (i32, i32, i32) {
    %c0_i32 = arith.constant 0 : i32
    %c0_i32_0 = arith.constant 0 : i32
    %c0_i32_1 = arith.constant 0 : i32
    return %arg0, %c0_i32, %c0_i32_0 : i32, i32, i32
  }
}

</mosaic_0001>

<llo_original>
// kernel: tpu_custom_call.1
$region0: #{tpu_custom_call.1}
  #allocation0 [shape = 'u32[]', space=smem, size = 0x4, offset = 0x4, fixed_abs, tag = 'smem constant byte address 0x4 - core index']
  #allocation1 [shape = 'u32[144,128]{1,0:T(1,128)}', space=vmem, size = 0x12000, scoped, tag = 'internal scratch']
  %s0 = inlined_call_operand.hbm [shape: f32[1,8,8], index: 0, kind: input, shape index: {}]
  %s1 = inlined_call_operand.hbm [shape: f32[8,8], index: 1, kind: input, shape index: {}]
  %s2 = inlined_call_operand.hbm [shape: f32[1,8,8], index: 2, kind: output, shape index: {0}]
  %s3 = inlined_call_operand.hbm [shape: f32[1,8,8], index: 3, kind: output, shape index: {1}]
  %4 = xla_tuple %s2, %s3
  %s5 = sld [smem:[#allocation0]]
  $region38: #{tpu_custom_call.1} parent=0
    _
  %s7 = ssub.s32 1, %s5
  %s8 = scalar_select 0, %s7, %s5
  $region1: #{tpu_custom_call.1} parent=0
    #allocation2 [shape = 'u8[4096]{0}', space=vmem, size = 0x1000, scoped, tag = 'input window, operand 0, single buffered']
    #allocation3 [shape = 's32[1]{0}', space=sflag, size = 0x4, scoped, tag = 'scoped memory for tpu_custom_call.1']
    #allocation4 [shape = 's32[1]{0}', space=sflag, size = 0x4, scoped, tag = 'scoped memory for tpu_custom_call.1']
    #allocation5 [shape = 'u8[4096]{0}', space=vmem, size = 0x1000, scoped, tag = 'input window, operand 1, single buffered']
    #allocation6 [shape = 's32[1]{0}', space=sflag, size = 0x4, scoped, tag = 'scoped memory for tpu_custom_call.1']
    #allocation7 [shape = 'u8[4096]{0}', space=vmem, size = 0x1000, scoped, tag = 'output window, operand 0, single buffered']
    #allocation8 [shape = 'u8[4096]{0}', space=vmem, size = 0x1000, scoped, tag = 'output window, operand 1, single buffered']
    #allocation9 [shape = 's32[1]{0}', space=sflag, size = 0x4, scoped, tag = 'scoped memory for tpu_custom_call.1']
    %9 = vsyncpa [#allocation3], 0
    %10 = vsyncpa [#allocation6], 0
    %11 = vsyncpa [#allocation4], 0
    %12 = vsyncpa [#allocation9], 0
    // Predicated region
    $region2: #{tpu_custom_call.1} parent=1 // pred_check
      _
    $region3: #{tpu_custom_call.1} parent=1 // pred_check_branch
      %14 = sbr.rel (0) target = $region5
    $region4: #{tpu_custom_call.1} parent=1 // pred_region
      %s16 = ssub.s32 128, 128
      %17 = vsyncadd [#allocation3], %s16
      %s19 = sshll.u32 [#allocation2], 4
      %s20 = int_to_ptr.vmem [resolvable:$true] %s19
      %22 = dma.hbm_to_vmem [thread:$0]  %s0, 128, %s20, [#allocation3]
    $region5: #{tpu_custom_call.1} parent=1 // pred_fallthru
      _
    // Predicated region
    $region6: #{tpu_custom_call.1} parent=1 // pred_check
      _
    $region7: #{tpu_custom_call.1} parent=1 // pred_check_branch
      %24 = sbr.rel (0) target = $region9
    $region8: #{tpu_custom_call.1} parent=1 // pred_region
      %s26 = ssub.s32 128, 128
      %27 = vsyncadd [#allocation6], %s26
      %s29 = sshll.u32 [#allocation5], 4
      %s30 = int_to_ptr.vmem [resolvable:$true] %s29
      %32 = dma.hbm_to_vmem [thread:$0]  %s1, 128, %s30, [#allocation6]
    $region9: #{tpu_custom_call.1} parent=1 // pred_fallthru
      _
    // Predicated region
    $region10: #{tpu_custom_call.1} parent=1 // pred_check
      _
    $region11: #{tpu_custom_call.1} parent=1 // pred_check_branch
      %34 = sbr.rel (0) target = $region13
    $region12: #{tpu_custom_call.1} parent=1 // pred_region
      %35 = dma.done [#allocation3], 128
    $region13: #{tpu_custom_call.1} parent=1 // pred_fallthru
      _
    // Predicated region
    $region14: #{tpu_custom_call.1} parent=1 // pred_check
      _
    $region15: #{tpu_custom_call.1} parent=1 // pred_check_branch
      %37 = sbr.rel (0) target = $region17
    $region16: #{tpu_custom_call.1} parent=1 // pred_region
      %38 = dma.done [#allocation6], 128
    $region17: #{tpu_custom_call.1} parent=1 // pred_fallthru
      _
    %p39 = scmp.eq.s32.totalorder 0, 0
    // Predicated region
    $region18: #{tpu_custom_call.1} parent=1 // pred_check
      %p40 = pneg %p39
    $region19: #{tpu_custom_call.1} parent=1 // pred_check_branch
      %42 = sbr.rel (%p40) target = $region21
    $region20: #{tpu_custom_call.1} parent=1 // pred_region
      %vm43 = vcmask 64512
      %44 = vst.msk [vmem:[#allocation7] sm:$0xff] %vm43, 0.0
      %45 = vst.msk [vmem:[#allocation8] sm:$0xff] %vm43, 0.0
    $region21: #{tpu_custom_call.1} parent=1 // pred_fallthru
      _
    %v46 = vld [vmem:[#allocation5] sm:$0x1]
    %v47 = vlaneseq
    %v48 = vshrl.u32 %v47, 7
    %v49 = vsub.s32 0, %v48
    %v50 = vrot.slane %v46, %v49
    %v51 = vld [vmem:[#allocation2] sm:$0xff]
    %53 = vset.pattern.permute.xlu0 0
    %54 = vperm.xlu0 %53, %v51
    %v55 = vpop.permute.xlu0 %54
    %v57 = vsub.f32 %v55, %v50
    %v58 = vmax.f32 %v57, 0.0
    %v59 = vadd.f32 %v58, 0.0
    %vm60 = vcmp.gt.f32.partialorder %v57, 1e-07
    %v61 = vsel %vm60, 1, 0
    %v62 = vcvt.s32.f32 %v61
    %v63 = vadd.f32 %v62, 0.0
    %v64 = vld [vmem:[#allocation7] sm:$0xff]
    %v65 = vadd.f32 %v64, %v59
    %vm66 = vcmask 64512
    %67 = vst.msk [vmem:[#allocation7] sm:$0xff] %vm66, %v65
    %v68 = vld [vmem:[#allocation8] sm:$0xff]
    %v69 = vadd.f32 %v68, %v63
    %70 = vst.msk [vmem:[#allocation8] sm:$0xff] %vm66, %v69
    %v71 = vld [vmem:[#allocation5 + $0x1] sm:$0x1]
    %v72 = vlaneseq
    %v73 = vshrl.u32 %v72, 7
    %v74 = vsub.s32 0, %v73
    %v75 = vrot.slane %v71, %v74
    %v76 = vld [vmem:[#allocation2] sm:$0xff]
    %78 = vset.pattern.permute.xlu0 1
    %79 = vperm.xlu0 %78, %v76
    %v80 = vpop.permute.xlu0 %79
    %v82 = vsub.f32 %v80, %v75
    %v83 = vmax.f32 %v82, 0.0
    %v84 = vadd.f32 %v83, 0.0
    %vm85 = vcmp.gt.f32.partialorder %v82, 1e-07
    %v86 = vsel %vm85, 1, 0
    %v87 = vcvt.s32.f32 %v86
    %v88 = vadd.f32 %v87, 0.0
    %v89 = vld [vmem:[#allocation7] sm:$0xff]
    %v90 = vadd.f32 %v89, %v84
    %91 = vst.msk [vmem:[#allocation7] sm:$0xff] %vm66, %v90
    %v92 = vld [vmem:[#allocation8] sm:$0xff]
    %v93 = vadd.f32 %v92, %v88
    %94 = vst.msk [vmem:[#allocation8] sm:$0xff] %vm66, %v93
    %v95 = vld [vmem:[#allocation5 + $0x2] sm:$0x1]
    %v96 = vlaneseq
    %v97 = vshrl.u32 %v96, 7
    %v98 = vsub.s32 0, %v97
    %v99 = vrot.slane %v95, %v98
    %v100 = vld [vmem:[#allocation2] sm:$0xff]
    %102 = vset.pattern.permute.xlu0 2
    %103 = vperm.xlu0 %102, %v100
    %v104 = vpop.permute.xlu0 %103
    %v106 = vsub.f32 %v104, %v99
    %v107 = vmax.f32 %v106, 0.0
    %v108 = vadd.f32 %v107, 0.0
    %vm109 = vcmp.gt.f32.partialorder %v106, 1e-07
    %v110 = vsel %vm109, 1, 0
    %v111 = vcvt.s32.f32 %v110
    %v112 = vadd.f32 %v111, 0.0
    %v113 = vld [vmem:[#allocation7] sm:$0xff]
    %v114 = vadd.f32 %v113, %v108
    %115 = vst.msk [vmem:[#allocation7] sm:$0xff] %vm66, %v114
    %v116 = vld [vmem:[#allocation8] sm:$0xff]
    %v117 = vadd.f32 %v116, %v112
    %118 = vst.msk [vmem:[#allocation8] sm:$0xff] %vm66, %v117
    %v119 = vld [vmem:[#allocation5 + $0x3] sm:$0x1]
    %v120 = vlaneseq
    %v121 = vshrl.u32 %v120, 7
    %v122 = vsub.s32 0, %v121
    %v123 = vrot.slane %v119, %v122
    %v124 = vld [vmem:[#allocation2] sm:$0xff]
    %126 = vset.pattern.permute.xlu0 3
    %127 = vperm.xlu0 %126, %v124
    %v128 = vpop.permute.xlu0 %127
    %v130 = vsub.f32 %v128, %v123
    %v131 = vmax.f32 %v130, 0.0
    %v132 = vadd.f32 %v131, 0.0
    %vm133 = vcmp.gt.f32.partialorder %v130, 1e-07
    %v134 = vsel %vm133, 1, 0
    %v135 = vcvt.s32.f32 %v134
    %v136 = vadd.f32 %v135, 0.0
    %v137 = vld [vmem:[#allocation7] sm:$0xff]
    %v138 = vadd.f32 %v137, %v132
    %139 = vst.msk [vmem:[#allocation7] sm:$0xff] %vm66, %v138
    %v140 = vld [vmem:[#allocation8] sm:$0xff]
    %v141 = vadd.f32 %v140, %v136
    %142 = vst.msk [vmem:[#allocation8] sm:$0xff] %vm66, %v141
    %v143 = vld [vmem:[#allocation5 + $0x4] sm:$0x1]
    %v144 = vlaneseq
    %v145 = vshrl.u32 %v144, 7
    %v146 = vsub.s32 0, %v145
    %v147 = vrot.slane %v143, %v146
    %v148 = vld [vmem:[#allocation2] sm:$0xff]
    %150 = vset.pattern.permute.xlu0 4
    %151 = vperm.xlu0 %150, %v148
    %v152 = vpop.permute.xlu0 %151
    %v154 = vsub.f32 %v152, %v147
    %v155 = vmax.f32 %v154, 0.0
    %v156 = vadd.f32 %v155, 0.0
    %vm157 = vcmp.gt.f32.partialorder %v154, 1e-07
    %v158 = vsel %vm157, 1, 0
    %v159 = vcvt.s32.f32 %v158
    %v160 = vadd.f32 %v159, 0.0
    %v161 = vld [vmem:[#allocation7] sm:$0xff]
    %v162 = vadd.f32 %v161, %v156
    %163 = vst.msk [vmem:[#allocation7] sm:$0xff] %vm66, %v162
    %v164 = vld [vmem:[#allocation8] sm:$0xff]
    %v165 = vadd.f32 %v164, %v160
    %166 = vst.msk [vmem:[#allocation8] sm:$0xff] %vm66, %v165
    %v167 = vld [vmem:[#allocation5 + $0x5] sm:$0x1]
    %v168 = vlaneseq
    %v169 = vshrl.u32 %v168, 7
    %v170 = vsub.s32 0, %v169
    %v171 = vrot.slane %v167, %v170
    %v172 = vld [vmem:[#allocation2] sm:$0xff]
    %174 = vset.pattern.permute.xlu0 5
    %175 = vperm.xlu0 %174, %v172
    %v176 = vpop.permute.xlu0 %175
    %v178 = vsub.f32 %v176, %v171
    %v179 = vmax.f32 %v178, 0.0
    %v180 = vadd.f32 %v179, 0.0
    %vm181 = vcmp.gt.f32.partialorder %v178, 1e-07
    %v182 = vsel %vm181, 1, 0
    %v183 = vcvt.s32.f32 %v182
    %v184 = vadd.f32 %v183, 0.0
    %v185 = vld [vmem:[#allocation7] sm:$0xff]
    %v186 = vadd.f32 %v185, %v180
    %187 = vst.msk [vmem:[#allocation7] sm:$0xff] %vm66, %v186
    %v188 = vld [vmem:[#allocation8] sm:$0xff]
    %v189 = vadd.f32 %v188, %v184
    %190 = vst.msk [vmem:[#allocation8] sm:$0xff] %vm66, %v189
    %v191 = vld [vmem:[#allocation5 + $0x6] sm:$0x1]
    %v192 = vlaneseq
    %v193 = vshrl.u32 %v192, 7
    %v194 = vsub.s32 0, %v193
    %v195 = vrot.slane %v191, %v194
    %v196 = vld [vmem:[#allocation2] sm:$0xff]
    %198 = vset.pattern.permute.xlu0 6
    %199 = vperm.xlu0 %198, %v196
    %v200 = vpop.permute.xlu0 %199
    %v202 = vsub.f32 %v200, %v195
    %v203 = vmax.f32 %v202, 0.0
    %v204 = vadd.f32 %v203, 0.0
    %vm205 = vcmp.gt.f32.partialorder %v202, 1e-07
    %v206 = vsel %vm205, 1, 0
    %v207 = vcvt.s32.f32 %v206
    %v208 = vadd.f32 %v207, 0.0
    %v209 = vld [vmem:[#allocation7] sm:$0xff]
    %v210 = vadd.f32 %v209, %v204
    %211 = vst.msk [vmem:[#allocation7] sm:$0xff] %vm66, %v210
    %v212 = vld [vmem:[#allocation8] sm:$0xff]
    %v213 = vadd.f32 %v212, %v208
    %214 = vst.msk [vmem:[#allocation8] sm:$0xff] %vm66, %v213
    %v215 = vld [vmem:[#allocation5 + $0x7] sm:$0x1]
    %v216 = vlaneseq
    %v217 = vshrl.u32 %v216, 7
    %v218 = vsub.s32 0, %v217
    %v219 = vrot.slane %v215, %v218
    %v220 = vld [vmem:[#allocation2] sm:$0xff]
    %222 = vset.pattern.permute.xlu0 7
    %223 = vperm.xlu0 %222, %v220
    %v224 = vpop.permute.xlu0 %223
    %v226 = vsub.f32 %v224, %v219
    %v227 = vmax.f32 %v226, 0.0
    %v228 = vadd.f32 %v227, 0.0
    %vm229 = vcmp.gt.f32.partialorder %v226, 1e-07
    %v230 = vsel %vm229, 1, 0
    %v231 = vcvt.s32.f32 %v230
    %v232 = vadd.f32 %v231, 0.0
    %v233 = vld [vmem:[#allocation7] sm:$0xff]
    %v234 = vadd.f32 %v233, %v228
    %235 = vst.msk [vmem:[#allocation7] sm:$0xff] %vm66, %v234
    %v236 = vld [vmem:[#allocation8] sm:$0xff]
    %v237 = vadd.f32 %v236, %v232
    %238 = vst.msk [vmem:[#allocation8] sm:$0xff] %vm66, %v237
    // Predicated region
    $region22: #{tpu_custom_call.1} parent=1 // pred_check
      _
    $region23: #{tpu_custom_call.1} parent=1 // pred_check_branch
      %240 = sbr.rel (0) target = $region25
    $region24: #{tpu_custom_call.1} parent=1 // pred_region
      %s242 = ssub.s32 128, 128
      %243 = vsyncadd [#allocation4], %s242
      %s245 = sshll.u32 [#allocation7], 4
      %s246 = int_to_ptr.vmem [resolvable:$true] %s245
      %248 = dma.vmem_to_hbm [thread:$0]  %s246, 128, %s2, [#allocation4]
    $region25: #{tpu_custom_call.1} parent=1 // pred_fallthru
      _
    // Predicated region
    $region26: #{tpu_custom_call.1} parent=1 // pred_check
      _
    $region27: #{tpu_custom_call.1} parent=1 // pred_check_branch
      %250 = sbr.rel (0) target = $region29
    $region28: #{tpu_custom_call.1} parent=1 // pred_region
      %s252 = ssub.s32 128, 128
      %253 = vsyncadd [#allocation9], %s252
      %s255 = sshll.u32 [#allocation8], 4
      %s256 = int_to_ptr.vmem [resolvable:$true] %s255
      %258 = dma.vmem_to_hbm [thread:$0]  %s256, 128, %s3, [#allocation9]
    $region29: #{tpu_custom_call.1} parent=1 // pred_fallthru
      _
    // Predicated region
    $region30: #{tpu_custom_call.1} parent=1 // pred_check
      _
    $region31: #{tpu_custom_call.1} parent=1 // pred_check_branch
      %260 = sbr.rel (0) target = $region33
    $region32: #{tpu_custom_call.1} parent=1 // pred_region
      %261 = dma.done [#allocation4], 128
    $region33: #{tpu_custom_call.1} parent=1 // pred_fallthru
      _
    // Predicated region
    $region34: #{tpu_custom_call.1} parent=1 // pred_check
      _
    $region35: #{tpu_custom_call.1} parent=1 // pred_check_branch
      %263 = sbr.rel (0) target = $region37
    $region36: #{tpu_custom_call.1} parent=1 // pred_region
      %264 = dma.done [#allocation9], 128
    $region37: #{tpu_custom_call.1} parent=1 // pred_fallthru
      _
    %265 = vsyncpa [#allocation3], 1
    %266 = vsyncpa [#allocation6], 1
    %267 = vsyncpa [#allocation4], 1
    %268 = vsyncpa [#allocation9], 1

</llo_original>
